<compile_context>
chip_gen: v7x
topology: tpu7x:2x2x1
jax: 0.10.0
libtpu: 0.0.40
codegen_flags: <defaults>
</compile_context>

<pallas_src>
import jax
import jax.numpy as jnp
from jax.experimental import pallas as pl
from jax.experimental.pallas import tpu as pltpu


# (4096, 128) f32 tile ~ 2 MiB; double-buffered input + output streams ~ 8 MiB
# VMEM plus the tiny resident weight -> safely inside the 32 MiB scoped default
# on v5e/v6e/v7x while amortizing the ~0.35 us/step pipeline overhead.
_MAX_TILE_ROWS = 4096


def _linear_sub_up_kernel(x_ref, w_ref, o_ref):
    """out = x + x @ W   (W is the f32 symplectic-update matrix)."""
    x = x_ref[...].astype(jnp.float32)        # (tile_rows, width)
    w = w_ref[...]                            # (width, width), f32, resident
    width = w.shape[0]
    if width <= 8:
        # Unpacked tiny-dim fallback: unrolled VPU broadcast-FMAs — a K=N<=8 MXU
        # matmul would use <1% of the systolic array and pay full pipe latency.
        acc = x[:, 0:1] * w[0:1, :]
        for k in range(1, width):
            acc = acc + x[:, k:k + 1] * w[k:k + 1, :]
    else:
        acc = jnp.dot(x, w, preferred_element_type=jnp.float32)
    # Single full-width store of the whole block.
    o_ref[...] = (x + acc).astype(o_ref.dtype)


def linear_sub_up_forward(pq: jnp.ndarray, A: jnp.ndarray, dim: int,
                          inverse: bool = False,
                          tile_rows: int | None = None) -> jnp.ndarray:
    """pq: (batch, 2*dim) -> (batch, 2*dim); matches the PyTorch module forward."""
    batch, feat = pq.shape
    assert feat == 2 * dim, f"expected features == 2*dim, got {feat} vs {2 * dim}"

    # Hoisted weight precompute, kept in f32 regardless of activation dtype.
    a32 = A.astype(jnp.float32)
    sign = jnp.float32(-1.0 if inverse else 1.0)
    S = sign * (a32 + a32.T)                                  # (dim, dim)
    N = jnp.zeros((feat, feat), jnp.float32).at[dim:, :dim].set(S)

    # Lane packing: fold G rows into one 128-lane row when shapes allow.
    if feat < 128 and 128 % feat == 0 and batch % (128 // feat) == 0:
        G = 128 // feat
    else:
        G = 1
    if G > 1:
        x = pq.reshape(batch // G, G * feat)                  # free row-major re-view
        W = jnp.kron(jnp.eye(G, dtype=jnp.float32), N)        # (128, 128) block-diag
    else:
        x = pq
        W = N
    n_rows, width = x.shape

    # Batch-row tiling: grid over rows, sublane-aligned tiles.
    if tile_rows is None:
        tile_rows = _MAX_TILE_ROWS
    tile_rows = min(tile_rows, n_rows)
    if tile_rows != n_rows and tile_rows % 8 != 0:
        tile_rows = max(8, (tile_rows // 8) * 8)
    grid = (pl.cdiv(n_rows, tile_rows),)

    # No input/output aliasing on purpose: the module returns a fresh tensor and
    # aliasing without a donated input makes XLA insert a defensive full copy,
    # doubling HBM traffic for this memory-bound op.
    itemsize = jnp.dtype(pq.dtype).itemsize
    cost = pl.CostEstimate(
        flops=2 * n_rows * width * width + n_rows * width,
        transcendentals=0,
        bytes_accessed=2 * n_rows * width * itemsize + width * width * 4,
    )

    out = pl.pallas_call(
        _linear_sub_up_kernel,
        out_shape=jax.ShapeDtypeStruct((n_rows, width), pq.dtype),
        grid=grid,
        in_specs=[
            pl.BlockSpec((tile_rows, width), lambda i: (i, 0)),   # streamed row tiles
            pl.BlockSpec((width, width), lambda i: (0, 0)),       # tiny resident weight
        ],
        out_specs=pl.BlockSpec((tile_rows, width), lambda i: (i, 0)),
        compiler_params=pltpu.CompilerParams(
            dimension_semantics=("parallel",),    # megacore: split row grid across TCs
        ),
        cost_estimate=cost,
    )(x, W)

    return out.reshape(batch, feat) if G > 1 else out


def _reference(pq, A, dim, inverse):
    sign = -1.0 if inverse else 1.0
    M = jnp.eye(2 * dim, dtype=jnp.float32)
    M = M.at[0:dim, dim:2 * dim].set(sign * (A + A.T))
    return ((M @ pq.astype(jnp.float32).T).T).astype(pq.dtype)


if __name__ == "__main__":
    key = jax.random.PRNGKey(0)
    k_a, k_x, k_a2, k_x2, k_a3, k_x3 = jax.random.split(key, 6)

    # Default module config (dim=2): packed 128-lane MXU path (G=32).
    dim, batch = 2, 512
    A = jax.random.normal(k_a, (dim, dim), dtype=jnp.float32)
    pq = jax.random.normal(k_x, (batch, 2 * dim), dtype=jnp.float32)
    out = jax.block_until_ready(
        linear_sub_up_forward(pq, A, dim, inverse=False, tile_rows=8))  # multi-step grid
    assert jnp.allclose(out, _reference(pq, A, dim, False), atol=1e-5, rtol=1e-5)

    out_inv = jax.block_until_ready(linear_sub_up_forward(pq, A, dim, inverse=True))
    assert jnp.allclose(out_inv, _reference(pq, A, dim, True), atol=1e-5, rtol=1e-5)

    # Unpacked tiny-width path (feat=6 does not divide 128): VPU fallback.
    dim, batch = 3, 40
    A = jax.random.normal(k_a2, (dim, dim), dtype=jnp.float32)
    pq = jax.random.normal(k_x2, (batch, 2 * dim), dtype=jnp.float32)
    out = jax.block_until_ready(linear_sub_up_forward(pq, A, dim))
    assert jnp.allclose(out, _reference(pq, A, dim, False), atol=1e-5, rtol=1e-5)

    # Unpacked MXU path (feat=24, batch not divisible by the pack factor).
    dim, batch = 12, 32
    A = jax.random.normal(k_a3, (dim, dim), dtype=jnp.float32)
    pq = jax.random.normal(k_x3, (batch, 2 * dim), dtype=jnp.float32)
    out = jax.block_until_ready(linear_sub_up_forward(pq, A, dim))
    assert jnp.allclose(out, _reference(pq, A, dim, False), atol=1e-5, rtol=1e-5)

    print("KERNEL_OK")
</pallas_src>

<mosaic_0001>
module attributes {stable_mosaic.version = 11 : i64} {
  func.func @_linear_sub_up_kernel(%arg0: i32, %arg1: memref<8x128xf32, #tpu.memory_space<vmem>>, %arg2: memref<128x128xf32, #tpu.memory_space<vmem>>, %arg3: memref<8x128xf32, #tpu.memory_space<vmem>>) attributes {dimension_semantics = [#tpu.dimension_semantics<parallel>], iteration_bounds = array<i64: 2>, scalar_prefetch = 0 : i64, scratch_operands = 0 : i64, tpu.core_type = #tpu.core_type<tc>, window_params = [{transform_indices = @transform_0, window_bounds = array<i64: 8, 128>}, {pipeline_mode = #tpu.pipeline_mode<synchronous>, transform_indices = @transform_1, window_bounds = array<i64: 128, 128>}, {transform_indices = @transform_2, window_bounds = array<i64: 8, 128>}]} {
    %c0 = arith.constant 0 : index
    %c0_0 = arith.constant 0 : index
    %0 = vector.load %arg1[%c0, %c0_0] : memref<8x128xf32, #tpu.memory_space<vmem>>, vector<8x128xf32>
    %c0_1 = arith.constant 0 : index
    %c0_2 = arith.constant 0 : index
    %1 = vector.load %arg2[%c0_1, %c0_2] : memref<128x128xf32, #tpu.memory_space<vmem>>, vector<128x128xf32>
    %cst = arith.constant dense<0.000000e+00> : vector<8x128xf32>
    %2 = tpu.matmul %0, %1, %cst {dimension_numbers = #tpu.dot_dimension_numbers<[1], [0], [0], [1], [0, 0, 1, 1], [], []>} : vector<8x128xf32>, vector<128x128xf32>, vector<8x128xf32> -> vector<8x128xf32>
    %3 = arith.addf %0, %2 : vector<8x128xf32>
    %c0_3 = arith.constant 0 : index
    %c0_4 = arith.constant 0 : index
    %4 = vector.load %arg3[%c0_3, %c0_4] : memref<8x128xf32, #tpu.memory_space<vmem>>, vector<8x128xf32>
    tpu.vector_store %arg3[%c0_3, %c0_4], %3 {strides = array<i32>} : memref<8x128xf32, #tpu.memory_space<vmem>>, vector<8x128xf32>,
    return
  }
  func.func @transform_0(%arg0: i32) -> (i32, i32) {
    %c0_i32 = arith.constant 0 : i32
    %c0_i32_0 = arith.constant 0 : i32
    return %arg0, %c0_i32 : i32, i32
  }
  func.func @transform_1(%arg0: i32) -> (i32, i32) {
    %c0_i32 = arith.constant 0 : i32
    %c0_i32_0 = arith.constant 0 : i32
    %c0_i32_1 = arith.constant 0 : i32
    return %c0_i32, %c0_i32_0 : i32, i32
  }
  func.func @transform_2(%arg0: i32) -> (i32, i32) {
    %c0_i32 = arith.constant 0 : i32
    %c0_i32_0 = arith.constant 0 : i32
    return %arg0, %c0_i32 : i32, i32
  }
}

</mosaic_0001>

<llo_original>
// kernel: tpu_custom_call.1
$region0: #{tpu_custom_call.1}
  #allocation0 [shape = 'u32[]', space=smem, size = 0x4, offset = 0x4, fixed_abs, tag = 'smem constant byte address 0x4 - core index']
  #allocation1 [shape = 'u32[144,128]{1,0:T(1,128)}', space=vmem, size = 0x12000, scoped, tag = 'internal scratch']
  %s0 = inlined_call_operand.hbm [shape: f32[16,128], index: 0, kind: input, shape index: {}]
  %s1 = inlined_call_operand.hbm [shape: f32[128,128], index: 1, kind: input, shape index: {}]
  %s2 = inlined_call_operand.hbm [shape: f32[16,128], index: 2, kind: output, shape index: {}]
  %s3 = sld [smem:[#allocation0]]
  $region49: #{tpu_custom_call.1} parent=0
    _
  %s5 = ssub.s32 1, %s3
  %s6 = scalar_select 0, %s5, %s3
  $region1: #{tpu_custom_call.1} parent=0
    #allocation2 [shape = 'u8[8192]{0}', space=vmem, size = 0x2000, scoped, tag = 'input window, operand 0']
    #allocation3 [shape = 's32[2]{0}', space=sflag, size = 0x8, scoped, tag = 'scoped memory for tpu_custom_call.1']
    #allocation4 [shape = 's32[2]{0}', space=sflag, size = 0x8, scoped, tag = 'scoped memory for tpu_custom_call.1']
    #allocation5 [shape = 'u8[65536]{0}', space=vmem, size = 0x10000, scoped, tag = 'input window, operand 1, single buffered']
    #allocation6 [shape = 's32[1]{0}', space=sflag, size = 0x4, scoped, tag = 'scoped memory for tpu_custom_call.1']
    #allocation7 [shape = 'u8[8192]{0}', space=vmem, size = 0x2000, scoped, tag = 'output window, operand 0']
    %7 = vsyncpa [#allocation3], 0
    %s8 = scalar_lea.sflag [#allocation3], 1
    %9 = vsyncpa %s8, 0
    %10 = vsyncpa [#allocation6], 0
    %11 = vsyncpa [#allocation4], 0
    %s12 = scalar_lea.sflag [#allocation4], 1
    %13 = vsyncpa %s12, 0
    loop: start=0, step=1, limit=4
    $region2: #{tpu_custom_call.1} parent=1 // loop_pre_header
      _
    $region3: #{tpu_custom_call.1} parent=1 // loop_header
      %s15 = sphi 0, %s19
      %p16 = scmp.ge.s32.totalorder %s15, 4
      %s25 = sphi 0, %s27
      %s28 = sphi 0, %s25
      %s29 = sphi 0, %s28
      %s45 = sphi 0, %s29
      %s49 = sphi 0, %s49
      %s51 = sphi 0, %s49
      %s52 = sphi 0, %s51
      %s66 = sphi 0, %s52
      %s72 = sphi 0, %s74
      %s75 = sphi 0, %s72
      %s76 = sphi 0, %s75
      %s92 = sphi 0, %s76
    $region4: #{tpu_custom_call.1} parent=1 // loop_header_branch
      %18 = sbr.rel (%p16) target = $region8
    $region5: #{tpu_custom_call.1} parent=1 // loop_body
      %s20 = ssub.s32 %s15, 1
      %s21 = ssub.s32 %s15, 2
      %s22 = sadd.s32 %s15, 1
      %s23 = ssub.s32 %s15, %s22
      %p24 = scmp.eq.s32.totalorder %s23, 0
      %s26 = sadd.s32 %s25, 1
      %s27 = scalar_select %p24, %s25, %s26
      %p30 = pneg %p24
      %p31 = scmp.eq.s32.totalorder %s15, 1
      %p32 = por %p30, %p31
      %p33 = scmp.ne.s32.totalorder %s25, %s28
      %p34 = scmp.eq.s32.totalorder %s15, 0
      %p35 = por %p33, %p34
      %p36 = scmp.ne.s32.totalorder %s25, %s28
      %p37 = scmp.eq.s32.totalorder %s20, 1
      %p38 = por %p36, %p37
      %p39 = scmp.ne.s32.totalorder %s28, %s29
      %p40 = scmp.eq.s32.totalorder %s20, 0
      %p41 = por %p39, %p40
      %p42 = scmp.ne.s32.totalorder %s28, %s29
      %p43 = scmp.eq.s32.totalorder %s21, 1
      %p44 = por %p42, %p43
      %p46 = scmp.ne.s32.totalorder %s29, %s45
      %p47 = scmp.eq.s32.totalorder %s21, 0
      %p48 = por %p46, %p47
      %s50 = sadd.s32 %s49, 1
      %p53 = scmp.eq.s32.totalorder %s15, 1
      %p54 = scmp.ne.s32.totalorder %s49, %s51
      %p55 = scmp.eq.s32.totalorder %s15, 0
      %p56 = por %p54, %p55
      %p57 = scmp.ne.s32.totalorder %s49, %s51
      %p58 = scmp.eq.s32.totalorder %s20, 1
      %p59 = por %p57, %p58
      %p60 = scmp.ne.s32.totalorder %s51, %s52
      %p61 = scmp.eq.s32.totalorder %s20, 0
      %p62 = por %p60, %p61
      %p63 = scmp.ne.s32.totalorder %s51, %s52
      %p64 = scmp.eq.s32.totalorder %s21, 1
      %p65 = por %p63, %p64
      %p67 = scmp.ne.s32.totalorder %s52, %s66
      %p68 = scmp.eq.s32.totalorder %s21, 0
      %p69 = por %p67, %p68
      %s70 = ssub.s32 %s15, %s22
      %p71 = scmp.eq.s32.totalorder %s70, 0
      %s73 = sadd.s32 %s72, 1
      %s74 = scalar_select %p71, %s72, %s73
      %p77 = pneg %p71
      %p78 = scmp.eq.s32.totalorder %s15, 1
      %p79 = por %p77, %p78
      %p80 = scmp.ne.s32.totalorder %s72, %s75
      %p81 = scmp.eq.s32.totalorder %s15, 0
      %p82 = por %p80, %p81
      %p83 = scmp.ne.s32.totalorder %s72, %s75
      %p84 = scmp.eq.s32.totalorder %s20, 1
      %p85 = por %p83, %p84
      %p86 = scmp.ne.s32.totalorder %s75, %s76
      %p87 = scmp.eq.s32.totalorder %s20, 0
      %p88 = por %p86, %p87
      %p89 = scmp.ne.s32.totalorder %s75, %s76
      %p90 = scmp.eq.s32.totalorder %s21, 1
      %p91 = por %p89, %p90
      %p93 = scmp.ne.s32.totalorder %s76, %s92
      %p94 = scmp.eq.s32.totalorder %s21, 0
      %p95 = por %p93, %p94
      %p96 = scmp.le.s32.totalorder 1, %s15
      %p97 = scmp.lt.s32.totalorder %s15, 3
      %p98 = pnand %p96, %p97
      %p99 = pneg %p98
      // Predicated region
      $region9: #{tpu_custom_call.1} parent=5 // pred_check
        _
      $region10: #{tpu_custom_call.1} parent=5 // pred_check_branch
        %101 = sbr.rel (%p98) target = $region12
      $region11: #{tpu_custom_call.1} parent=5 // pred_region
        %s102 = ssub.s32 %s15, 1
        // Predicated region
        $region13: #{tpu_custom_call.1} parent=11 // pred_check
          %p103 = pneg %p62
        $region14: #{tpu_custom_call.1} parent=11 // pred_check_branch
          %105 = sbr.rel (%p103) target = $region16
        $region15: #{tpu_custom_call.1} parent=11 // pred_region
          %s107 = ssub.s32 2048, 2048
          %108 = vsyncadd [#allocation6], %s107
          %s109 = sshll.u32 [#allocation5], 4
          %s110 = int_to_ptr.vmem [resolvable:$true] %s109
          %115 = dma.hbm_to_vmem [thread:$0]  %s1, 2048, %s110, [#allocation6], 128, 128, 8
        $region16: #{tpu_custom_call.1} parent=11 // pred_fallthru
          _
      $region12: #{tpu_custom_call.1} parent=5 // pred_fallthru
        _
      %p116 = scmp.lt.s32.totalorder %s15, 2
      // Predicated region
      $region17: #{tpu_custom_call.1} parent=5 // pred_check
        %p117 = pneg %p116
      $region18: #{tpu_custom_call.1} parent=5 // pred_check_branch
        %119 = sbr.rel (%p117) target = $region20
      $region19: #{tpu_custom_call.1} parent=5 // pred_region
        // Predicated region
        $region21: #{tpu_custom_call.1} parent=19 // pred_check
          %p120 = pneg %p35
        $region22: #{tpu_custom_call.1} parent=19 // pred_check_branch
          %122 = sbr.rel (%p120) target = $region24
        $region23: #{tpu_custom_call.1} parent=19 // pred_region
          %s123 = sand.u32 %s25, 1
          %s124 = scalar_lea.sflag [#allocation3], %s123
          %s125 = sand.u32 %s25, 1
          %s126 = smul.addr %s125, 8
          %s127 = scalar_lea.vmem [#allocation2], %s126
          %s129 = ssub.s32 128, 128
          %130 = vsyncadd %s124, %s129
          %s131 = smul.addr %s15, 128
          %s132 = scalar_lea.hbm %s0, %s131
          %s134 = sshll.u32 %s127, 4
          %s135 = int_to_ptr.vmem [resolvable:$true] %s134
          %137 = dma.hbm_to_vmem [thread:$0]  %s132, 128, %s135, %s124
        $region24: #{tpu_custom_call.1} parent=19 // pred_fallthru
          _
      $region20: #{tpu_custom_call.1} parent=5 // pred_fallthru
        _
      %p138 = scmp.le.s32.totalorder 1, %s15
      %p139 = scmp.lt.s32.totalorder %s15, 3
      %p140 = pnand %p138, %p139
      %p141 = pneg %p140
      // Predicated region
      $region25: #{tpu_custom_call.1} parent=5 // pred_check
        _
      $region26: #{tpu_custom_call.1} parent=5 // pred_check_branch
        %143 = sbr.rel (%p140) target = $region28
      $region27: #{tpu_custom_call.1} parent=5 // pred_region
        %s144 = ssub.s32 %s15, 1
        %s145 = sand.u32 %s28, 1
        %s146 = scalar_lea.sflag [#allocation3], %s145
        %s147 = sand.u32 %s28, 1
        %s148 = smul.addr %s147, 8
        %s149 = scalar_lea.vmem [#allocation2], %s148
        // Predicated region
        $region29: #{tpu_custom_call.1} parent=27 // pred_check
          %p150 = pneg %p41
        $region30: #{tpu_custom_call.1} parent=27 // pred_check_branch
          %152 = sbr.rel (%p150) target = $region32
        $region31: #{tpu_custom_call.1} parent=27 // pred_region
          %153 = dma.done %s146, 128
        $region32: #{tpu_custom_call.1} parent=27 // pred_fallthru
          _
        // Predicated region
        $region33: #{tpu_custom_call.1} parent=27 // pred_check
          %p154 = pneg %p62
        $region34: #{tpu_custom_call.1} parent=27 // pred_check_branch
          %156 = sbr.rel (%p154) target = $region36
        $region35: #{tpu_custom_call.1} parent=27 // pred_region
          %157 = dma.done [#allocation6], 2048
        $region36: #{tpu_custom_call.1} parent=27 // pred_fallthru
          _
        %s158 = sand.u32 %s28, 1
        %s159 = scalar_lea.sflag [#allocation3], %s158
        %s160 = sand.u32 %s28, 1
        %s161 = smul.addr %s160, 8
        %s162 = scalar_lea.vmem [#allocation2], %s161
        %p163 = pneg %p41
        %p164 = pneg %p38
        %p165 = pneg %p62
        %p166 = pneg %p59
        %p167 = pneg %p88
        %p168 = pneg %p85
        %s169 = sand.u32 %s75, 1
        %s170 = scalar_lea.sflag [#allocation4], %s169
        %s171 = sand.u32 %s75, 1
        %s172 = smul.addr %s171, 8
        %s173 = scalar_lea.vmem [#allocation7], %s172
        %v174 = vld [vmem:[%s149] sm:$0xff]
        %v175 = vld [vmem:[#allocation5] sm:$0xff]
        %v176 = vld [vmem:[#allocation5 + $0x8] sm:$0xff]
        %v177 = vld [vmem:[#allocation5 + $0x10] sm:$0xff]
        %v178 = vld [vmem:[#allocation5 + $0x18] sm:$0xff]
        %v179 = vld [vmem:[#allocation5 + $0x20] sm:$0xff]
        %v180 = vld [vmem:[#allocation5 + $0x28] sm:$0xff]
        %v181 = vld [vmem:[#allocation5 + $0x30] sm:$0xff]
        %v182 = vld [vmem:[#allocation5 + $0x38] sm:$0xff]
        %v183 = vld [vmem:[#allocation5 + $0x40] sm:$0xff]
        %v184 = vld [vmem:[#allocation5 + $0x48] sm:$0xff]
        %v185 = vld [vmem:[#allocation5 + $0x50] sm:$0xff]
        %v186 = vld [vmem:[#allocation5 + $0x58] sm:$0xff]
        %v187 = vld [vmem:[#allocation5 + $0x60] sm:$0xff]
        %v188 = vld [vmem:[#allocation5 + $0x68] sm:$0xff]
        %v189 = vld [vmem:[#allocation5 + $0x70] sm:$0xff]
        %v190 = vld [vmem:[#allocation5 + $0x78] sm:$0xff]
        %191 = vmatprep.subr.mxu0 0.0
        %192 = vmatpush1.msra.mxu0 %v175
        %193 = vmatprep.subr.mxu0 0.0
        %194 = vmatpush1.msra.mxu0 %v176
        %195 = vmatprep.subr.mxu0 0.0
        %196 = vmatpush1.msra.mxu0 %v177
        %197 = vmatprep.subr.mxu0 0.0
        %198 = vmatpush1.msra.mxu0 %v178
        %199 = vmatprep.subr.mxu0 0.0
        %200 = vmatpush1.msra.mxu0 %v179
        %201 = vmatprep.subr.mxu0 0.0
        %202 = vmatpush1.msra.mxu0 %v180
        %203 = vmatprep.subr.mxu0 0.0
        %204 = vmatpush1.msra.mxu0 %v181
        %205 = vmatprep.subr.mxu0 0.0
        %206 = vmatpush1.msra.mxu0 %v182
        %207 = vmatprep.subr.mxu0 0.0
        %208 = vmatpush1.msra.mxu0 %v183
        %209 = vmatprep.subr.mxu0 0.0
        %210 = vmatpush1.msra.mxu0 %v184
        %211 = vmatprep.subr.mxu0 0.0
        %212 = vmatpush1.msra.mxu0 %v185
        %213 = vmatprep.subr.mxu0 0.0
        %214 = vmatpush1.msra.mxu0 %v186
        %215 = vmatprep.subr.mxu0 0.0
        %216 = vmatpush1.msra.mxu0 %v187
        %217 = vmatprep.subr.mxu0 0.0
        %218 = vmatpush1.msra.mxu0 %v188
        %219 = vmatprep.subr.mxu0 0.0
        %220 = vmatpush1.msra.mxu0 %v189
        %221 = vmatprep.subr.mxu0 0.0
        %222 = vmatpush1.msra.mxu0 %v190
        %223 = vmatprep.subr.mxu0 0.0
        %224 = vmatpush1.msra.mxu0 0.0
        %225 = vmatprep.subr.mxu0 0.0
        %226 = vmatpush1.msra.mxu0 0.0
        %227 = vmatprep.subr.mxu0 0.0
        %228 = vmatpush1.msra.mxu0 0.0
        %229 = vmatprep.subr.mxu0 0.0
        %230 = vmatpush1.msra.mxu0 0.0
        %231 = vmatprep.subr.mxu0 0.0
        %232 = vmatpush1.msra.mxu0 0.0
        %233 = vmatprep.subr.mxu0 0.0
        %234 = vmatpush1.msra.mxu0 0.0
        %235 = vmatprep.subr.mxu0 0.0
        %236 = vmatpush1.msra.mxu0 0.0
        %237 = vmatprep.subr.mxu0 0.0
        %238 = vmatpush1.msra.mxu0 0.0
        %239 = vmatprep.subr.mxu0 0.0
        %240 = vmatpush1.msra.mxu0 0.0
        %241 = vmatprep.subr.mxu0 0.0
        %242 = vmatpush1.msra.mxu0 0.0
        %243 = vmatprep.subr.mxu0 0.0
        %244 = vmatpush1.msra.mxu0 0.0
        %245 = vmatprep.subr.mxu0 0.0
        %246 = vmatpush1.msra.mxu0 0.0
        %247 = vmatprep.subr.mxu0 0.0
        %248 = vmatpush1.msra.mxu0 0.0
        %249 = vmatprep.subr.mxu0 0.0
        %250 = vmatpush1.msra.mxu0 0.0
        %251 = vmatprep.subr.mxu0 0.0
        %252 = vmatpush1.msra.mxu0 0.0
        %253 = vmatprep.subr.mxu0 0.0
        %254 = vmatpush1.msra.mxu0 0.0
        %255 = vmatprep.mubr.f32.mxu0 0.0
        %256 = vmatmul.mubr.f32.gmra.mrb[0].mxu0 %v174
        %v257 = vpop.f32.mrb[0].mxu0
        %v258 = vadd.f32 0.0, %v257
        %v259 = vpop.f32.mrb[0].mxu0
        %260 = vdwg.mxu0
        %v261 = vadd.f32 %v174, %v258
        %262 = vst [vmem:[%s173] sm:$0xff] %v261
        %s263 = sand.u32 %s75, 1
        %s264 = scalar_lea.sflag [#allocation4], %s263
        %s265 = sand.u32 %s75, 1
        %s266 = smul.addr %s265, 8
        %s267 = scalar_lea.vmem [#allocation7], %s266
        // Predicated region
        $region37: #{tpu_custom_call.1} parent=27 // pred_check
          %p268 = pneg %p85
        $region38: #{tpu_custom_call.1} parent=27 // pred_check_branch
          %270 = sbr.rel (%p268) target = $region40
        $region39: #{tpu_custom_call.1} parent=27 // pred_region
          %s272 = ssub.s32 128, 128
          %273 = vsyncadd %s264, %s272
          %s274 = smul.addr %s20, 128
          %s275 = scalar_lea.hbm %s2, %s274
          %s277 = sshll.u32 %s267, 4
          %s278 = int_to_ptr.vmem [resolvable:$true] %s277
          %280 = dma.vmem_to_hbm [thread:$0]  %s278, 128, %s275, %s264
        $region40: #{tpu_custom_call.1} parent=27 // pred_fallthru
          _
      $region28: #{tpu_custom_call.1} parent=5 // pred_fallthru
        _
      %p281 = scmp.le.s32.totalorder 2, %s15
      // Predicated region
      $region41: #{tpu_custom_call.1} parent=5 // pred_check
        %p282 = pneg %p281
      $region42: #{tpu_custom_call.1} parent=5 // pred_check_branch
        %284 = sbr.rel (%p282) target = $region44
      $region43: #{tpu_custom_call.1} parent=5 // pred_region
        %s285 = ssub.s32 %s15, 2
        // Predicated region
        $region45: #{tpu_custom_call.1} parent=43 // pred_check
          %p286 = pneg %p91
        $region46: #{tpu_custom_call.1} parent=43 // pred_check_branch
          %288 = sbr.rel (%p286) target = $region48
        $region47: #{tpu_custom_call.1} parent=43 // pred_region
          %s289 = sand.u32 %s76, 1
          %s290 = scalar_lea.sflag [#allocation4], %s289
          %s291 = sand.u32 %s76, 1
          %s292 = smul.addr %s291, 8
          %s293 = scalar_lea.vmem [#allocation7], %s292
          %294 = dma.done %s290, 128
        $region48: #{tpu_custom_call.1} parent=43 // pred_fallthru
          _
      $region44: #{tpu_custom_call.1} parent=5 // pred_fallthru
        _
    $region6: #{tpu_custom_call.1} parent=1 // loop_footer
      %s19 = sadd.s32 1, %s15
    $region7: #{tpu_custom_call.1} parent=1 // loop_footer_branch
      %14 = sbr.rel target = $region3
    $region8: #{tpu_custom_call.1} parent=1 // loop_exit
      _
    %295 = vsyncpa [#allocation3], 1
    %s296 = scalar_lea.sflag [#allocation3], 1
    %297 = vsyncpa %s296, 1
    %298 = vsyncpa [#allocation6], 1
    %299 = vsyncpa [#allocation4], 1
    %s300 = scalar_lea.sflag [#allocation4], 1
    %301 = vsyncpa %s300, 1

</llo_original>
